<compile_context>
chip_gen: v5e
topology: v5e:2x2
jax: 0.10.0
libtpu: 0.0.40
codegen_flags: <defaults>
</compile_context>

<pallas_src>
import math

import jax
import jax.numpy as jnp
from jax.experimental import pallas as pl
from jax.experimental.pallas import tpu as pltpu


def _round_up(x: int, m: int) -> int:
    return (x + m - 1) // m * m


def sngp_kernel(x_ref, wenc_t_ref, wgp_t_ref, bgp_ref, beta_t_ref, logits_ref):
    # x_ref:      (TB, F)       flattened image features (batch tile)
    # wenc_t_ref: (F, D_in)     hidden_map weight, pre-transposed to (in, out)
    # wgp_t_ref:  (D_in, H)     GP random-feature weight W, pre-transposed
    # bgp_ref:    (1, H)        fused bias: b_enc @ W_gp^T - b_gp   (f32)
    # beta_t_ref: (H, K_pad)    C * beta^T, zero-padded on the lane axis
    # logits_ref: (TB, K_pad)   lane-dense output block

    # hidden_map linear (bias folded into bgp): x @ We^T      -> (TB, D_in)
    enc = jnp.dot(x_ref[...], wenc_t_ref[...],
                  preferred_element_type=jnp.float32)

    # GP.propagate_gp_layer: C * cos(F.linear(enc, -W, b))
    #   = C * cos(enc @ W^T - b)                               (cos is even)
    # with b_enc folded: h = (x @ We^T) @ Wg^T + (be @ Wg^T - b)
    h = jnp.dot(enc.astype(wgp_t_ref.dtype), wgp_t_ref[...],
                preferred_element_type=jnp.float32) + bgp_ref[...]
    phi = jnp.cos(h)                                           # (TB, H), f32
    # C scale is folded into beta in the wrapper.

    # GP.forward: logits = Phi @ beta^T                        -> (TB, K_pad)
    logits_ref[...] = jnp.dot(phi.astype(beta_t_ref.dtype), beta_t_ref[...],
                              preferred_element_type=jnp.float32)


def sngp_forward(x, w_enc, b_enc, w_gp, b_gp, beta, c_scale,
                 *, batch_tile: int = 256, mxu_dtype=jnp.float32):
    """Fused SNGP forward.  x: (B, C, H, W) or (B, F).  Returns (B, K) logits."""
    B = x.shape[0]
    x_flat = x.reshape(B, -1)
    F_flat = x_flat.shape[1]
    D_in = w_enc.shape[0]
    H = w_gp.shape[0]
    K = beta.shape[0]

    # --- one-time wrapper-side weight prep (tiny vs. the batched matmuls) ---
    # MXU-canonical (K-dim on sublanes, N-dim on lanes) layouts.
    wenc_t = w_enc.astype(mxu_dtype).T                                # (F, D_in)
    wgp_t = w_gp.astype(mxu_dtype).T                                  # (D_in, H)

    # Fold the GP scale C into beta and pad K up to a lane-dense multiple of
    # 128 so the final store is unmasked; sliced back to K below.
    K_pad = _round_up(K, 128)
    beta_t = jnp.zeros((H, K_pad), mxu_dtype)
    beta_t = beta_t.at[:, :K].set(
        (c_scale * beta.astype(jnp.float32)).T.astype(mxu_dtype))     # (H, K_pad)

    # Fuse both biases: h = (x @ We^T) @ Wg^T + (b_enc @ Wg^T - b_gp).
    bgp_fused = (b_enc.reshape(1, D_in).astype(jnp.float32)
                 @ w_gp.astype(jnp.float32).T
                 - b_gp.reshape(1, H).astype(jnp.float32))            # (1, H)

    # Pad batch to a multiple of the tile; tile is >= 8 rows (f32 sublane),
    # 128/256 rows when the batch is large enough.
    tb = min(batch_tile, _round_up(B, 8))
    B_pad = _round_up(B, tb)
    x_mxu = x_flat.astype(mxu_dtype)
    if B_pad != B:
        x_mxu = jnp.pad(x_mxu, ((0, B_pad - B), (0, 0)))

    pinned = lambda shape: pl.BlockSpec(shape, lambda i: (0, 0))

    out = pl.pallas_call(
        sngp_kernel,
        out_shape=jax.ShapeDtypeStruct((B_pad, K_pad), jnp.float32),
        grid_spec=pltpu.PrefetchScalarGridSpec(
            num_scalar_prefetch=0,
            grid=(B_pad // tb,),
            in_specs=[
                pl.BlockSpec((tb, F_flat), lambda i: (i, 0)),  # x: pipelined
                pinned((F_flat, D_in)),                        # weights pinned
                pinned((D_in, H)),
                pinned((1, H)),
                pinned((H, K_pad)),
            ],
            out_specs=pl.BlockSpec((tb, K_pad), lambda i: (i, 0)),
        ),
        compiler_params=pltpu.CompilerParams(
            dimension_semantics=("parallel",)),  # shard batch tiles over TCs
    )(x_mxu, wenc_t, wgp_t, bgp_fused, beta_t)

    return out[:B, :K]


if __name__ == "__main__":
    # Small, SNGP-consistent shapes.
    B, C, Himg, Wimg = 2, 4, 16, 16          # NCHW input
    F_flat = C * Himg * Wimg                 # 1024
    gp_input_size = 128
    gp_hidden_size = 256
    gp_output_size = 10
    gp_scale = 2.0
    C_const = math.sqrt(gp_scale / gp_hidden_size)

    key = jax.random.PRNGKey(0)
    kx, kwe, kbe, kwg, kbg, kbeta = jax.random.split(key, 6)

    # Deterministic parameter init (matching the shapes in GP.__init__).
    x = jax.random.normal(kx, (B, C, Himg, Wimg), dtype=jnp.float32)
    w_enc = jax.random.normal(kwe, (gp_input_size, F_flat), jnp.float32) * 0.02
    b_enc = jax.random.normal(kbe, (1, gp_input_size), jnp.float32) * 0.02
    w_gp = jax.random.normal(kwg, (gp_hidden_size, gp_input_size), jnp.float32)
    b_gp = 2.0 * jnp.pi * jax.random.uniform(kbg, (1, gp_hidden_size), jnp.float32)
    beta = jax.random.normal(kbeta, (gp_output_size, gp_hidden_size), jnp.float32)

    logits = sngp_forward(x, w_enc, b_enc, w_gp, b_gp, beta, C_const)
    logits = jax.block_until_ready(logits)

    # Pure-JAX reference (matches the PyTorch forward exactly).
    x_flat = x.reshape(B, F_flat)
    enc_ref = x_flat @ w_enc.T + b_enc
    phi_ref = C_const * jnp.cos(enc_ref @ (-w_gp).T + b_gp)
    logits_ref = phi_ref @ beta.T

    assert logits.shape == (B, gp_output_size)
    assert jnp.allclose(logits, logits_ref, atol=1e-4, rtol=1e-4)

    print("KERNEL_OK")
</pallas_src>

<mosaic_0001>
module attributes {stable_mosaic.version = 11 : i64} {
  func.func @sngp_kernel(%arg0: i32, %arg1: memref<8x1024xf32, #tpu.memory_space<vmem>>, %arg2: memref<1024x128xf32, #tpu.memory_space<vmem>>, %arg3: memref<128x256xf32, #tpu.memory_space<vmem>>, %arg4: memref<1x256xf32, #tpu.memory_space<vmem>>, %arg5: memref<256x128xf32, #tpu.memory_space<vmem>>, %arg6: memref<8x128xf32, #tpu.memory_space<vmem>>) attributes {dimension_semantics = [#tpu.dimension_semantics<parallel>], iteration_bounds = array<i64: 1>, scalar_prefetch = 0 : i64, scratch_operands = 0 : i64, tpu.core_type = #tpu.core_type<tc>, window_params = [{transform_indices = @transform_0, window_bounds = array<i64: 8, 1024>}, {pipeline_mode = #tpu.pipeline_mode<synchronous>, transform_indices = @transform_1, window_bounds = array<i64: 1024, 128>}, {pipeline_mode = #tpu.pipeline_mode<synchronous>, transform_indices = @transform_2, window_bounds = array<i64: 128, 256>}, {pipeline_mode = #tpu.pipeline_mode<synchronous>, transform_indices = @transform_3, window_bounds = array<i64: 1, 256>}, {pipeline_mode = #tpu.pipeline_mode<synchronous>, transform_indices = @transform_4, window_bounds = array<i64: 256, 128>}, {transform_indices = @transform_5, window_bounds = array<i64: 8, 128>}]} {
    %c0 = arith.constant 0 : index
    %c0_0 = arith.constant 0 : index
    %0 = vector.load %arg1[%c0, %c0_0] : memref<8x1024xf32, #tpu.memory_space<vmem>>, vector<8x1024xf32>
    %c0_1 = arith.constant 0 : index
    %c0_2 = arith.constant 0 : index
    %1 = vector.load %arg2[%c0_1, %c0_2] : memref<1024x128xf32, #tpu.memory_space<vmem>>, vector<1024x128xf32>
    %cst = arith.constant dense<0.000000e+00> : vector<8x128xf32>
    %2 = tpu.matmul %0, %1, %cst {dimension_numbers = #tpu.dot_dimension_numbers<[1], [0], [0], [1], [0, 0, 1, 1], [], []>} : vector<8x1024xf32>, vector<1024x128xf32>, vector<8x128xf32> -> vector<8x128xf32>
    %c0_3 = arith.constant 0 : index
    %c0_4 = arith.constant 0 : index
    %3 = vector.load %arg3[%c0_3, %c0_4] : memref<128x256xf32, #tpu.memory_space<vmem>>, vector<128x256xf32>
    %cst_5 = arith.constant dense<0.000000e+00> : vector<8x256xf32>
    %4 = tpu.matmul %2, %3, %cst_5 {dimension_numbers = #tpu.dot_dimension_numbers<[1], [0], [0], [1], [0, 0, 1, 1], [], []>} : vector<8x128xf32>, vector<128x256xf32>, vector<8x256xf32> -> vector<8x256xf32>
    %c0_6 = arith.constant 0 : index
    %c0_7 = arith.constant 0 : index
    %5 = vector.load %arg4[%c0_6, %c0_7] : memref<1x256xf32, #tpu.memory_space<vmem>>, vector<1x256xf32>
    %6 = vector.broadcast %5 : vector<1x256xf32> to vector<8x256xf32>
    %7 = arith.addf %4, %6 : vector<8x256xf32>
    %8 = math.cos %7 : vector<8x256xf32>
    %c0_8 = arith.constant 0 : index
    %c0_9 = arith.constant 0 : index
    %9 = vector.load %arg5[%c0_8, %c0_9] : memref<256x128xf32, #tpu.memory_space<vmem>>, vector<256x128xf32>
    %cst_10 = arith.constant dense<0.000000e+00> : vector<8x128xf32>
    %10 = tpu.matmul %8, %9, %cst_10 {dimension_numbers = #tpu.dot_dimension_numbers<[1], [0], [0], [1], [0, 0, 1, 1], [], []>} : vector<8x256xf32>, vector<256x128xf32>, vector<8x128xf32> -> vector<8x128xf32>
    %c0_11 = arith.constant 0 : index
    %c0_12 = arith.constant 0 : index
    %11 = vector.load %arg6[%c0_11, %c0_12] : memref<8x128xf32, #tpu.memory_space<vmem>>, vector<8x128xf32>
    tpu.vector_store %arg6[%c0_11, %c0_12], %10 {strides = array<i32>} : memref<8x128xf32, #tpu.memory_space<vmem>>, vector<8x128xf32>,
    return
  }
  func.func @transform_0(%arg0: i32) -> (i32, i32) {
    %c0_i32 = arith.constant 0 : i32
    %c0_i32_0 = arith.constant 0 : i32
    return %arg0, %c0_i32 : i32, i32
  }
  func.func @transform_1(%arg0: i32) -> (i32, i32) {
    %c0_i32 = arith.constant 0 : i32
    %c0_i32_0 = arith.constant 0 : i32
    %c0_i32_1 = arith.constant 0 : i32
    return %c0_i32, %c0_i32_0 : i32, i32
  }
  func.func @transform_2(%arg0: i32) -> (i32, i32) {
    %c0_i32 = arith.constant 0 : i32
    %c0_i32_0 = arith.constant 0 : i32
    %c0_i32_1 = arith.constant 0 : i32
    return %c0_i32, %c0_i32_0 : i32, i32
  }
  func.func @transform_3(%arg0: i32) -> (i32, i32) {
    %c0_i32 = arith.constant 0 : i32
    %c0_i32_0 = arith.constant 0 : i32
    %c0_i32_1 = arith.constant 0 : i32
    return %c0_i32, %c0_i32_0 : i32, i32
  }
  func.func @transform_4(%arg0: i32) -> (i32, i32) {
    %c0_i32 = arith.constant 0 : i32
    %c0_i32_0 = arith.constant 0 : i32
    %c0_i32_1 = arith.constant 0 : i32
    return %c0_i32, %c0_i32_0 : i32, i32
  }
  func.func @transform_5(%arg0: i32) -> (i32, i32) {
    %c0_i32 = arith.constant 0 : i32
    %c0_i32_0 = arith.constant 0 : i32
    return %arg0, %c0_i32 : i32, i32
  }
}

</mosaic_0001>

<llo_original>
// kernel: tpu_custom_call.1
$region0: #{tpu_custom_call.1}
  #allocation0 [shape = 'u32[]', space=smem, size = 0x4, offset = 0x4, fixed_abs, tag = 'smem constant byte address 0x4 - core index']
  #allocation1 [shape = 'u32[72,128]{1,0:T(1,128)}', space=vmem, size = 0x9000, scoped, tag = 'internal scratch']
  %s0 = inlined_call_operand.hbm [shape: f32[8,1024], index: 0, kind: input, shape index: {}]
  %s1 = inlined_call_operand.hbm [shape: f32[1024,128], index: 1, kind: input, shape index: {}]
  %s2 = inlined_call_operand.hbm [shape: f32[128,256], index: 2, kind: input, shape index: {}]
  %s3 = inlined_call_operand.vmem [shape: f32[1,256], index: 3, kind: input, shape index: {}]
  %s4 = inlined_call_operand.hbm [shape: f32[256,128], index: 4, kind: input, shape index: {}]
  %s5 = inlined_call_operand.hbm [shape: f32[8,128], index: 5, kind: output, shape index: {}]
  %s6 = sld [smem:[#allocation0]]
  $region46: #{tpu_custom_call.1} parent=0
    _
  %s8 = ssub.s32 1, %s6
  %s9 = scalar_select 0, %s8, %s6
  $region1: #{tpu_custom_call.1} parent=0
    #allocation2 [shape = 'u8[32768]{0}', space=vmem, size = 0x8000, scoped, tag = 'input window, operand 0, single buffered']
    #allocation3 [shape = 's32[1]{0}', space=sflag, size = 0x4, scoped, tag = 'scoped memory for tpu_custom_call.1']
    #allocation4 [shape = 's32[1]{0}', space=sflag, size = 0x4, scoped, tag = 'scoped memory for tpu_custom_call.1']
    #allocation5 [shape = 'u8[524288]{0}', space=vmem, size = 0x80000, scoped, tag = 'input window, operand 1, single buffered']
    #allocation6 [shape = 's32[1]{0}', space=sflag, size = 0x4, scoped, tag = 'scoped memory for tpu_custom_call.1']
    #allocation7 [shape = 'u8[131072]{0}', space=vmem, size = 0x20000, scoped, tag = 'input window, operand 2, single buffered']
    #allocation8 [shape = 'u8[131072]{0}', space=vmem, size = 0x20000, scoped, tag = 'input window, operand 4, single buffered']
    #allocation9 [shape = 's32[1]{0}', space=sflag, size = 0x4, scoped, tag = 'scoped memory for tpu_custom_call.1']
    #allocation10 [shape = 'u8[4096]{0}', space=vmem, size = 0x1000, scoped, tag = 'output window, operand 0, single buffered']
    %10 = vsyncpa [#allocation3], 0
    %11 = vsyncpa [#allocation6], 0
    %12 = vsyncpa [#allocation9], 0
    %13 = vsyncpa [#allocation4], 0
    // Predicated region
    $region2: #{tpu_custom_call.1} parent=1 // pred_check
      _
    $region3: #{tpu_custom_call.1} parent=1 // pred_check_branch
      %15 = sbr.rel (0) target = $region5
    $region4: #{tpu_custom_call.1} parent=1 // pred_region
      %17 = vsyncadd [#allocation3], 0
      %s19 = sshll.u32 %s0, 4
      %s20 = int_to_ptr.hbm [resolvable:$true] %s19
      %s21 = sshll.u32 [#allocation2], 4
      %s22 = int_to_ptr.vmem [resolvable:$true] %s21
      %24 = dma.hbm_to_vmem [thread:$0]  %s20, 1024, %s22, [#allocation3]
    $region5: #{tpu_custom_call.1} parent=1 // pred_fallthru
      _
    // Predicated region
    $region6: #{tpu_custom_call.1} parent=1 // pred_check
      _
    $region7: #{tpu_custom_call.1} parent=1 // pred_check_branch
      %26 = sbr.rel (0) target = $region9
    $region8: #{tpu_custom_call.1} parent=1 // pred_region
      %28 = vsyncadd [#allocation6], 0
      %s29 = sshll.u32 %s1, 4
      %s30 = int_to_ptr.hbm [resolvable:$true] %s29
      %s31 = sshll.u32 [#allocation5], 4
      %s32 = int_to_ptr.vmem [resolvable:$true] %s31
      %37 = dma.hbm_to_vmem [thread:$0]  %s30, 16384, %s32, [#allocation6], 128, 128, 8
    $region9: #{tpu_custom_call.1} parent=1 // pred_fallthru
      _
    // Predicated region
    $region10: #{tpu_custom_call.1} parent=1 // pred_check
      _
    $region11: #{tpu_custom_call.1} parent=1 // pred_check_branch
      %39 = sbr.rel (0) target = $region13
    $region12: #{tpu_custom_call.1} parent=1 // pred_region
      %41 = vsyncadd [#allocation6], 0
      %s42 = sshll.u32 %s2, 4
      %s43 = int_to_ptr.hbm [resolvable:$true] %s42
      %s44 = sshll.u32 [#allocation7], 4
      %s45 = int_to_ptr.vmem [resolvable:$true] %s44
      %50 = dma.hbm_to_vmem [thread:$0]  %s43, 4096, %s45, [#allocation6], 256, 256, 16
    $region13: #{tpu_custom_call.1} parent=1 // pred_fallthru
      _
    // Predicated region
    $region14: #{tpu_custom_call.1} parent=1 // pred_check
      _
    $region15: #{tpu_custom_call.1} parent=1 // pred_check_branch
      %52 = sbr.rel (0) target = $region17
    $region16: #{tpu_custom_call.1} parent=1 // pred_region
      _
    $region17: #{tpu_custom_call.1} parent=1 // pred_fallthru
      _
    // Predicated region
    $region18: #{tpu_custom_call.1} parent=1 // pred_check
      _
    $region19: #{tpu_custom_call.1} parent=1 // pred_check_branch
      %54 = sbr.rel (0) target = $region21
    $region20: #{tpu_custom_call.1} parent=1 // pred_region
      %56 = vsyncadd [#allocation9], 0
      %s57 = sshll.u32 %s4, 4
      %s58 = int_to_ptr.hbm [resolvable:$true] %s57
      %s59 = sshll.u32 [#allocation8], 4
      %s60 = int_to_ptr.vmem [resolvable:$true] %s59
      %65 = dma.hbm_to_vmem [thread:$0]  %s58, 4096, %s60, [#allocation9], 128, 128, 8
    $region21: #{tpu_custom_call.1} parent=1 // pred_fallthru
      _
    // Predicated region
    $region22: #{tpu_custom_call.1} parent=1 // pred_check
      _
    $region23: #{tpu_custom_call.1} parent=1 // pred_check_branch
      %67 = sbr.rel (0) target = $region25
    $region24: #{tpu_custom_call.1} parent=1 // pred_region
      %69 = dma.done [#allocation3], 1024
    $region25: #{tpu_custom_call.1} parent=1 // pred_fallthru
      _
    // Predicated region
    $region26: #{tpu_custom_call.1} parent=1 // pred_check
      _
    $region27: #{tpu_custom_call.1} parent=1 // pred_check_branch
      %71 = sbr.rel (0) target = $region29
    $region28: #{tpu_custom_call.1} parent=1 // pred_region
      %73 = dma.done [#allocation6], 16384
    $region29: #{tpu_custom_call.1} parent=1 // pred_fallthru
      _
    // Predicated region
    $region30: #{tpu_custom_call.1} parent=1 // pred_check
      _
    $region31: #{tpu_custom_call.1} parent=1 // pred_check_branch
      %75 = sbr.rel (0) target = $region33
    $region32: #{tpu_custom_call.1} parent=1 // pred_region
      %77 = dma.done [#allocation6], 4096
    $region33: #{tpu_custom_call.1} parent=1 // pred_fallthru
      _
    // Predicated region
    $region34: #{tpu_custom_call.1} parent=1 // pred_check
      _
    $region35: #{tpu_custom_call.1} parent=1 // pred_check_branch
      %79 = sbr.rel (0) target = $region37
    $region36: #{tpu_custom_call.1} parent=1 // pred_region
      %81 = dma.done [#allocation9], 4096
    $region37: #{tpu_custom_call.1} parent=1 // pred_fallthru
      _
    %v82 = vld [vmem:[#allocation2] sm:$0xff]
    %v83 = vld [vmem:[#allocation2 + $0x8] sm:$0xff]
    %v84 = vld [vmem:[#allocation2 + $0x10] sm:$0xff]
    %v85 = vld [vmem:[#allocation2 + $0x18] sm:$0xff]
    %v86 = vld [vmem:[#allocation2 + $0x20] sm:$0xff]
    %v87 = vld [vmem:[#allocation2 + $0x28] sm:$0xff]
    %v88 = vld [vmem:[#allocation2 + $0x30] sm:$0xff]
    %v89 = vld [vmem:[#allocation2 + $0x38] sm:$0xff]
    %v90 = vld [vmem:[#allocation5] sm:$0xff]
    %v91 = vld [vmem:[#allocation5 + $0x8] sm:$0xff]
    %v92 = vld [vmem:[#allocation5 + $0x10] sm:$0xff]
    %v93 = vld [vmem:[#allocation5 + $0x18] sm:$0xff]
    %v94 = vld [vmem:[#allocation5 + $0x20] sm:$0xff]
    %v95 = vld [vmem:[#allocation5 + $0x28] sm:$0xff]
    %v96 = vld [vmem:[#allocation5 + $0x30] sm:$0xff]
    %v97 = vld [vmem:[#allocation5 + $0x38] sm:$0xff]
    %v98 = vld [vmem:[#allocation5 + $0x40] sm:$0xff]
    %v99 = vld [vmem:[#allocation5 + $0x48] sm:$0xff]
    %v100 = vld [vmem:[#allocation5 + $0x50] sm:$0xff]
    %v101 = vld [vmem:[#allocation5 + $0x58] sm:$0xff]
    %v102 = vld [vmem:[#allocation5 + $0x60] sm:$0xff]
    %v103 = vld [vmem:[#allocation5 + $0x68] sm:$0xff]
    %v104 = vld [vmem:[#allocation5 + $0x70] sm:$0xff]
    %v105 = vld [vmem:[#allocation5 + $0x78] sm:$0xff]
    %v106 = vld [vmem:[#allocation5 + $0x80] sm:$0xff]
    %v107 = vld [vmem:[#allocation5 + $0x88] sm:$0xff]
    %v108 = vld [vmem:[#allocation5 + $0x90] sm:$0xff]
    %v109 = vld [vmem:[#allocation5 + $0x98] sm:$0xff]
    %v110 = vld [vmem:[#allocation5 + $0xa0] sm:$0xff]
    %v111 = vld [vmem:[#allocation5 + $0xa8] sm:$0xff]
    %v112 = vld [vmem:[#allocation5 + $0xb0] sm:$0xff]
    %v113 = vld [vmem:[#allocation5 + $0xb8] sm:$0xff]
    %v114 = vld [vmem:[#allocation5 + $0xc0] sm:$0xff]
    %v115 = vld [vmem:[#allocation5 + $0xc8] sm:$0xff]
    %v116 = vld [vmem:[#allocation5 + $0xd0] sm:$0xff]
    %v117 = vld [vmem:[#allocation5 + $0xd8] sm:$0xff]
    %v118 = vld [vmem:[#allocation5 + $0xe0] sm:$0xff]
    %v119 = vld [vmem:[#allocation5 + $0xe8] sm:$0xff]
    %v120 = vld [vmem:[#allocation5 + $0xf0] sm:$0xff]
    %v121 = vld [vmem:[#allocation5 + $0xf8] sm:$0xff]
    %v122 = vld [vmem:[#allocation5 + $0x100] sm:$0xff]
    %v123 = vld [vmem:[#allocation5 + $0x108] sm:$0xff]
    %v124 = vld [vmem:[#allocation5 + $0x110] sm:$0xff]
    %v125 = vld [vmem:[#allocation5 + $0x118] sm:$0xff]
    %v126 = vld [vmem:[#allocation5 + $0x120] sm:$0xff]
    %v127 = vld [vmem:[#allocation5 + $0x128] sm:$0xff]
    %v128 = vld [vmem:[#allocation5 + $0x130] sm:$0xff]
    %v129 = vld [vmem:[#allocation5 + $0x138] sm:$0xff]
    %v130 = vld [vmem:[#allocation5 + $0x140] sm:$0xff]
    %v131 = vld [vmem:[#allocation5 + $0x148] sm:$0xff]
    %v132 = vld [vmem:[#allocation5 + $0x150] sm:$0xff]
    %v133 = vld [vmem:[#allocation5 + $0x158] sm:$0xff]
    %v134 = vld [vmem:[#allocation5 + $0x160] sm:$0xff]
    %v135 = vld [vmem:[#allocation5 + $0x168] sm:$0xff]
    %v136 = vld [vmem:[#allocation5 + $0x170] sm:$0xff]
    %v137 = vld [vmem:[#allocation5 + $0x178] sm:$0xff]
    %v138 = vld [vmem:[#allocation5 + $0x180] sm:$0xff]
    %v139 = vld [vmem:[#allocation5 + $0x188] sm:$0xff]
    %v140 = vld [vmem:[#allocation5 + $0x190] sm:$0xff]
    %v141 = vld [vmem:[#allocation5 + $0x198] sm:$0xff]
    %v142 = vld [vmem:[#allocation5 + $0x1a0] sm:$0xff]
    %v143 = vld [vmem:[#allocation5 + $0x1a8] sm:$0xff]
    %v144 = vld [vmem:[#allocation5 + $0x1b0] sm:$0xff]
    %v145 = vld [vmem:[#allocation5 + $0x1b8] sm:$0xff]
    %v146 = vld [vmem:[#allocation5 + $0x1c0] sm:$0xff]
    %v147 = vld [vmem:[#allocation5 + $0x1c8] sm:$0xff]
    %v148 = vld [vmem:[#allocation5 + $0x1d0] sm:$0xff]
    %v149 = vld [vmem:[#allocation5 + $0x1d8] sm:$0xff]
    %v150 = vld [vmem:[#allocation5 + $0x1e0] sm:$0xff]
    %v151 = vld [vmem:[#allocation5 + $0x1e8] sm:$0xff]
    %v152 = vld [vmem:[#allocation5 + $0x1f0] sm:$0xff]
    %v153 = vld [vmem:[#allocation5 + $0x1f8] sm:$0xff]
    %v154 = vld [vmem:[#allocation5 + $0x200] sm:$0xff]
    %v155 = vld [vmem:[#allocation5 + $0x208] sm:$0xff]
    %v156 = vld [vmem:[#allocation5 + $0x210] sm:$0xff]
    %v157 = vld [vmem:[#allocation5 + $0x218] sm:$0xff]
    %v158 = vld [vmem:[#allocation5 + $0x220] sm:$0xff]
    %v159 = vld [vmem:[#allocation5 + $0x228] sm:$0xff]
    %v160 = vld [vmem:[#allocation5 + $0x230] sm:$0xff]
    %v161 = vld [vmem:[#allocation5 + $0x238] sm:$0xff]
    %v162 = vld [vmem:[#allocation5 + $0x240] sm:$0xff]
    %v163 = vld [vmem:[#allocation5 + $0x248] sm:$0xff]
    %v164 = vld [vmem:[#allocation5 + $0x250] sm:$0xff]
    %v165 = vld [vmem:[#allocation5 + $0x258] sm:$0xff]
    %v166 = vld [vmem:[#allocation5 + $0x260] sm:$0xff]
    %v167 = vld [vmem:[#allocation5 + $0x268] sm:$0xff]
    %v168 = vld [vmem:[#allocation5 + $0x270] sm:$0xff]
    %v169 = vld [vmem:[#allocation5 + $0x278] sm:$0xff]
    %v170 = vld [vmem:[#allocation5 + $0x280] sm:$0xff]
    %v171 = vld [vmem:[#allocation5 + $0x288] sm:$0xff]
    %v172 = vld [vmem:[#allocation5 + $0x290] sm:$0xff]
    %v173 = vld [vmem:[#allocation5 + $0x298] sm:$0xff]
    %v174 = vld [vmem:[#allocation5 + $0x2a0] sm:$0xff]
    %v175 = vld [vmem:[#allocation5 + $0x2a8] sm:$0xff]
    %v176 = vld [vmem:[#allocation5 + $0x2b0] sm:$0xff]
    %v177 = vld [vmem:[#allocation5 + $0x2b8] sm:$0xff]
    %v178 = vld [vmem:[#allocation5 + $0x2c0] sm:$0xff]
    %v179 = vld [vmem:[#allocation5 + $0x2c8] sm:$0xff]
    %v180 = vld [vmem:[#allocation5 + $0x2d0] sm:$0xff]
    %v181 = vld [vmem:[#allocation5 + $0x2d8] sm:$0xff]
    %v182 = vld [vmem:[#allocation5 + $0x2e0] sm:$0xff]
    %v183 = vld [vmem:[#allocation5 + $0x2e8] sm:$0xff]
    %v184 = vld [vmem:[#allocation5 + $0x2f0] sm:$0xff]
    %v185 = vld [vmem:[#allocation5 + $0x2f8] sm:$0xff]
    %v186 = vld [vmem:[#allocation5 + $0x300] sm:$0xff]
    %v187 = vld [vmem:[#allocation5 + $0x308] sm:$0xff]
    %v188 = vld [vmem:[#allocation5 + $0x310] sm:$0xff]
    %v189 = vld [vmem:[#allocation5 + $0x318] sm:$0xff]
    %v190 = vld [vmem:[#allocation5 + $0x320] sm:$0xff]
    %v191 = vld [vmem:[#allocation5 + $0x328] sm:$0xff]
    %v192 = vld [vmem:[#allocation5 + $0x330] sm:$0xff]
    %v193 = vld [vmem:[#allocation5 + $0x338] sm:$0xff]
    %v194 = vld [vmem:[#allocation5 + $0x340] sm:$0xff]
    %v195 = vld [vmem:[#allocation5 + $0x348] sm:$0xff]
    %v196 = vld [vmem:[#allocation5 + $0x350] sm:$0xff]
    %v197 = vld [vmem:[#allocation5 + $0x358] sm:$0xff]
    %v198 = vld [vmem:[#allocation5 + $0x360] sm:$0xff]
    %v199 = vld [vmem:[#allocation5 + $0x368] sm:$0xff]
    %v200 = vld [vmem:[#allocation5 + $0x370] sm:$0xff]
    %v201 = vld [vmem:[#allocation5 + $0x378] sm:$0xff]
    %v202 = vld [vmem:[#allocation5 + $0x380] sm:$0xff]
    %v203 = vld [vmem:[#allocation5 + $0x388] sm:$0xff]
    %v204 = vld [vmem:[#allocation5 + $0x390] sm:$0xff]
    %v205 = vld [vmem:[#allocation5 + $0x398] sm:$0xff]
    %v206 = vld [vmem:[#allocation5 + $0x3a0] sm:$0xff]
    %v207 = vld [vmem:[#allocation5 + $0x3a8] sm:$0xff]
    %v208 = vld [vmem:[#allocation5 + $0x3b0] sm:$0xff]
    %v209 = vld [vmem:[#allocation5 + $0x3b8] sm:$0xff]
    %v210 = vld [vmem:[#allocation5 + $0x3c0] sm:$0xff]
    %v211 = vld [vmem:[#allocation5 + $0x3c8] sm:$0xff]
    %v212 = vld [vmem:[#allocation5 + $0x3d0] sm:$0xff]
    %v213 = vld [vmem:[#allocation5 + $0x3d8] sm:$0xff]
    %v214 = vld [vmem:[#allocation5 + $0x3e0] sm:$0xff]
    %v215 = vld [vmem:[#allocation5 + $0x3e8] sm:$0xff]
    %v216 = vld [vmem:[#allocation5 + $0x3f0] sm:$0xff]
    %v217 = vld [vmem:[#allocation5 + $0x3f8] sm:$0xff]
    %218 = vmatpush.msra.mxu0 %v105
    %219 = vmatpush.msra.mxu0 %v104
    %220 = vmatpush.msra.mxu0 %v103
    %221 = vmatpush.msra.mxu0 %v102
    %222 = vmatpush.msra.mxu0 %v101
    %223 = vmatpush.msra.mxu0 %v100
    %224 = vmatpush.msra.mxu0 %v99
    %225 = vmatpush.msra.mxu0 %v98
    %226 = vmatpush.msra.mxu0 %v97
    %227 = vmatpush.msra.mxu0 %v96
    %228 = vmatpush.msra.mxu0 %v95
    %229 = vmatpush.msra.mxu0 %v94
    %230 = vmatpush.msra.mxu0 %v93
    %231 = vmatpush.msra.mxu0 %v92
    %232 = vmatpush.msra.mxu0 %v91
    %233 = vmatpush.msra.mxu0 %v90
    %234 = vmatmul.f32.gmra.mxu0 %v82
    %v235 = vpop.f32.mrf.mxu0
    %v236 = vadd.f32 0.0, %v235
    %237 = vdwg.mxu0
    %238 = vmatpush.msra.mxu0 %v121
    %239 = vmatpush.msra.mxu0 %v120
    %240 = vmatpush.msra.mxu0 %v119
    %241 = vmatpush.msra.mxu0 %v118
    %242 = vmatpush.msra.mxu0 %v117
    %243 = vmatpush.msra.mxu0 %v116
    %244 = vmatpush.msra.mxu0 %v115
    %245 = vmatpush.msra.mxu0 %v114
    %246 = vmatpush.msra.mxu0 %v113
    %247 = vmatpush.msra.mxu0 %v112
    %248 = vmatpush.msra.mxu0 %v111
    %249 = vmatpush.msra.mxu0 %v110
    %250 = vmatpush.msra.mxu0 %v109
    %251 = vmatpush.msra.mxu0 %v108
    %252 = vmatpush.msra.mxu0 %v107
    %253 = vmatpush.msra.mxu0 %v106
    %254 = vmatmul.f32.gmra.mxu0 %v83
    %v255 = vpop.f32.mrf.mxu0
    %v256 = vadd.f32 %v236, %v255
    %257 = vdwg.mxu0
    %258 = vmatpush.msra.mxu0 %v137
    %259 = vmatpush.msra.mxu0 %v136
    %260 = vmatpush.msra.mxu0 %v135
    %261 = vmatpush.msra.mxu0 %v134
    %262 = vmatpush.msra.mxu0 %v133
    %263 = vmatpush.msra.mxu0 %v132
    %264 = vmatpush.msra.mxu0 %v131
    %265 = vmatpush.msra.mxu0 %v130
    %266 = vmatpush.msra.mxu0 %v129
    %267 = vmatpush.msra.mxu0 %v128
    %268 = vmatpush.msra.mxu0 %v127
    %269 = vmatpush.msra.mxu0 %v126
    %270 = vmatpush.msra.mxu0 %v125
    %271 = vmatpush.msra.mxu0 %v124
    %272 = vmatpush.msra.mxu0 %v123
    %273 = vmatpush.msra.mxu0 %v122
    %274 = vmatmul.f32.gmra.mxu0 %v84
    %v275 = vpop.f32.mrf.mxu0
    %v276 = vadd.f32 %v256, %v275
    %277 = vdwg.mxu0
    %278 = vmatpush.msra.mxu0 %v153
    %279 = vmatpush.msra.mxu0 %v152
    %280 = vmatpush.msra.mxu0 %v151
    %281 = vmatpush.msra.mxu0 %v150
    %282 = vmatpush.msra.mxu0 %v149
    %283 = vmatpush.msra.mxu0 %v148
    %284 = vmatpush.msra.mxu0 %v147
    %285 = vmatpush.msra.mxu0 %v146
    %286 = vmatpush.msra.mxu0 %v145
    %287 = vmatpush.msra.mxu0 %v144
    %288 = vmatpush.msra.mxu0 %v143
    %289 = vmatpush.msra.mxu0 %v142
    %290 = vmatpush.msra.mxu0 %v141
    %291 = vmatpush.msra.mxu0 %v140
    %292 = vmatpush.msra.mxu0 %v139
    %293 = vmatpush.msra.mxu0 %v138
    %294 = vmatmul.f32.gmra.mxu0 %v85
    %v295 = vpop.f32.mrf.mxu0
    %v296 = vadd.f32 %v276, %v295
    %297 = vdwg.mxu0
    %298 = vmatpush.msra.mxu0 %v169
    %299 = vmatpush.msra.mxu0 %v168
    %300 = vmatpush.msra.mxu0 %v167
    %301 = vmatpush.msra.mxu0 %v166
    %302 = vmatpush.msra.mxu0 %v165
    %303 = vmatpush.msra.mxu0 %v164
    %304 = vmatpush.msra.mxu0 %v163
    %305 = vmatpush.msra.mxu0 %v162
    %306 = vmatpush.msra.mxu0 %v161
    %307 = vmatpush.msra.mxu0 %v160
    %308 = vmatpush.msra.mxu0 %v159
    %309 = vmatpush.msra.mxu0 %v158
    %310 = vmatpush.msra.mxu0 %v157
    %311 = vmatpush.msra.mxu0 %v156
    %312 = vmatpush.msra.mxu0 %v155
    %313 = vmatpush.msra.mxu0 %v154
    %314 = vmatmul.f32.gmra.mxu0 %v86
    %v315 = vpop.f32.mrf.mxu0
    %v316 = vadd.f32 %v296, %v315
    %317 = vdwg.mxu0
    %318 = vmatpush.msra.mxu0 %v185
    %319 = vmatpush.msra.mxu0 %v184
    %320 = vmatpush.msra.mxu0 %v183
    %321 = vmatpush.msra.mxu0 %v182
    %322 = vmatpush.msra.mxu0 %v181
    %323 = vmatpush.msra.mxu0 %v180
    %324 = vmatpush.msra.mxu0 %v179
    %325 = vmatpush.msra.mxu0 %v178
    %326 = vmatpush.msra.mxu0 %v177
    %327 = vmatpush.msra.mxu0 %v176
    %328 = vmatpush.msra.mxu0 %v175
    %329 = vmatpush.msra.mxu0 %v174
    %330 = vmatpush.msra.mxu0 %v173
    %331 = vmatpush.msra.mxu0 %v172
    %332 = vmatpush.msra.mxu0 %v171
    %333 = vmatpush.msra.mxu0 %v170
    %334 = vmatmul.f32.gmra.mxu0 %v87
    %v335 = vpop.f32.mrf.mxu0
    %v336 = vadd.f32 %v316, %v335
    %337 = vdwg.mxu0
    %338 = vmatpush.msra.mxu0 %v201
    %339 = vmatpush.msra.mxu0 %v200
    %340 = vmatpush.msra.mxu0 %v199
    %341 = vmatpush.msra.mxu0 %v198
    %342 = vmatpush.msra.mxu0 %v197
    %343 = vmatpush.msra.mxu0 %v196
    %344 = vmatpush.msra.mxu0 %v195
    %345 = vmatpush.msra.mxu0 %v194
    %346 = vmatpush.msra.mxu0 %v193
    %347 = vmatpush.msra.mxu0 %v192
    %348 = vmatpush.msra.mxu0 %v191
    %349 = vmatpush.msra.mxu0 %v190
    %350 = vmatpush.msra.mxu0 %v189
    %351 = vmatpush.msra.mxu0 %v188
    %352 = vmatpush.msra.mxu0 %v187
    %353 = vmatpush.msra.mxu0 %v186
    %354 = vmatmul.f32.gmra.mxu0 %v88
    %v355 = vpop.f32.mrf.mxu0
    %v356 = vadd.f32 %v336, %v355
    %357 = vdwg.mxu0
    %358 = vmatpush.msra.mxu0 %v217
    %359 = vmatpush.msra.mxu0 %v216
    %360 = vmatpush.msra.mxu0 %v215
    %361 = vmatpush.msra.mxu0 %v214
    %362 = vmatpush.msra.mxu0 %v213
    %363 = vmatpush.msra.mxu0 %v212
    %364 = vmatpush.msra.mxu0 %v211
    %365 = vmatpush.msra.mxu0 %v210
    %366 = vmatpush.msra.mxu0 %v209
    %367 = vmatpush.msra.mxu0 %v208
    %368 = vmatpush.msra.mxu0 %v207
    %369 = vmatpush.msra.mxu0 %v206
    %370 = vmatpush.msra.mxu0 %v205
    %371 = vmatpush.msra.mxu0 %v204
    %372 = vmatpush.msra.mxu0 %v203
    %373 = vmatpush.msra.mxu0 %v202
    %374 = vmatmul.f32.gmra.mxu0 %v89
    %v375 = vpop.f32.mrf.mxu0
    %v376 = vadd.f32 %v356, %v375
    %377 = vdwg.mxu0
    %v378 = vld [vmem:[#allocation7] sm:$0xff]
    %v379 = vld [vmem:[#allocation7 + $0x8] sm:$0xff]
    %v380 = vld [vmem:[#allocation7 + $0x10] sm:$0xff]
    %v381 = vld [vmem:[#allocation7 + $0x18] sm:$0xff]
    %v382 = vld [vmem:[#allocation7 + $0x20] sm:$0xff]
    %v383 = vld [vmem:[#allocation7 + $0x28] sm:$0xff]
    %v384 = vld [vmem:[#allocation7 + $0x30] sm:$0xff]
    %v385 = vld [vmem:[#allocation7 + $0x38] sm:$0xff]
    %v386 = vld [vmem:[#allocation7 + $0x40] sm:$0xff]
    %v387 = vld [vmem:[#allocation7 + $0x48] sm:$0xff]
    %v388 = vld [vmem:[#allocation7 + $0x50] sm:$0xff]
    %v389 = vld [vmem:[#allocation7 + $0x58] sm:$0xff]
    %v390 = vld [vmem:[#allocation7 + $0x60] sm:$0xff]
    %v391 = vld [vmem:[#allocation7 + $0x68] sm:$0xff]
    %v392 = vld [vmem:[#allocation7 + $0x70] sm:$0xff]
    %v393 = vld [vmem:[#allocation7 + $0x78] sm:$0xff]
    %v394 = vld [vmem:[#allocation7 + $0x80] sm:$0xff]
    %v395 = vld [vmem:[#allocation7 + $0x88] sm:$0xff]
    %v396 = vld [vmem:[#allocation7 + $0x90] sm:$0xff]
    %v397 = vld [vmem:[#allocation7 + $0x98] sm:$0xff]
    %v398 = vld [vmem:[#allocation7 + $0xa0] sm:$0xff]
    %v399 = vld [vmem:[#allocation7 + $0xa8] sm:$0xff]
    %v400 = vld [vmem:[#allocation7 + $0xb0] sm:$0xff]
    %v401 = vld [vmem:[#allocation7 + $0xb8] sm:$0xff]
    %v402 = vld [vmem:[#allocation7 + $0xc0] sm:$0xff]
    %v403 = vld [vmem:[#allocation7 + $0xc8] sm:$0xff]
    %v404 = vld [vmem:[#allocation7 + $0xd0] sm:$0xff]
    %v405 = vld [vmem:[#allocation7 + $0xd8] sm:$0xff]
    %v406 = vld [vmem:[#allocation7 + $0xe0] sm:$0xff]
    %v407 = vld [vmem:[#allocation7 + $0xe8] sm:$0xff]
    %v408 = vld [vmem:[#allocation7 + $0xf0] sm:$0xff]
    %v409 = vld [vmem:[#allocation7 + $0xf8] sm:$0xff]
    %v410 = vld [vmem:[%s3] sm:$0x3]
    %v412 = vperm.slane %v410, 0
    %v413 = vperm.slane %v410, 1
    %416 = vmatpush.msra.mxu0 %v408
    %417 = vmatpush.msra.mxu0 %v406
    %418 = vmatpush.msra.mxu0 %v404
    %419 = vmatpush.msra.mxu0 %v402
    %420 = vmatpush.msra.mxu0 %v400
    %421 = vmatpush.msra.mxu0 %v398
    %422 = vmatpush.msra.mxu0 %v396
    %423 = vmatpush.msra.mxu0 %v394
    %424 = vmatpush.msra.mxu0 %v392
    %425 = vmatpush.msra.mxu0 %v390
    %426 = vmatpush.msra.mxu0 %v388
    %427 = vmatpush.msra.mxu0 %v386
    %428 = vmatpush.msra.mxu0 %v384
    %429 = vmatpush.msra.mxu0 %v382
    %430 = vmatpush.msra.mxu0 %v380
    %431 = vmatpush.msra.mxu0 %v378
    %432 = vmatmul.f32.gmra.mxu0 %v376
    %v433 = vpop.f32.mrf.mxu0
    %v434 = vadd.f32 %v412, %v433
    %435 = vdwg.mxu0
    %436 = vmatpush.msra.mxu0 %v409
    %437 = vmatpush.msra.mxu0 %v407
    %438 = vmatpush.msra.mxu0 %v405
    %439 = vmatpush.msra.mxu0 %v403
    %440 = vmatpush.msra.mxu0 %v401
    %441 = vmatpush.msra.mxu0 %v399
    %442 = vmatpush.msra.mxu0 %v397
    %443 = vmatpush.msra.mxu0 %v395
    %444 = vmatpush.msra.mxu0 %v393
    %445 = vmatpush.msra.mxu0 %v391
    %446 = vmatpush.msra.mxu0 %v389
    %447 = vmatpush.msra.mxu0 %v387
    %448 = vmatpush.msra.mxu0 %v385
    %449 = vmatpush.msra.mxu0 %v383
    %450 = vmatpush.msra.mxu0 %v381
    %451 = vmatpush.msra.mxu0 %v379
    %452 = vmatmul.f32.gmra.mxu0 %v376
    %v453 = vpop.f32.mrf.mxu0
    %v454 = vadd.f32 %v413, %v453
    %455 = vdwg.mxu0
    %v456 = vand.u32 2147483647, %v434
    %vm457 = vcmp.le.f32.partialorder %v456, 0.7853982
    %vm458 = vcmp.lt.s32.totalorder %v434, 0
    %v459 = vand.u32 %v434, 2139095040
    %v460 = vshrl.u32 %v459, 23
    %v461 = vsub.s32 %v460, 127
    %v462 = vand.u32 2147483647, %v434
    %v463 = vand.u32 %v462, 8388607
    %v464 = vor.u32 %v463, 8388608
    %v465 = vsub.s32 0, %v464
    %v466 = vadd.s32 %v461, 1
    %vm467 = vcmp.gt.s32.totalorder %v466, 0
    %v468 = vsel %vm467, %v466, 0
    %v469 = vshrl.u32 %v468, 5
    %v470 = vand.u32 %v468, 31
    %v471 = vsub.s32 32, %v470
    %v472 = vshrl.u32 683565275, %v471
    %v473 = vshll.u32 683565275, %v470
    %v474 = vshrl.u32 2475754826, %v471
    %v475 = vor.u32 %v473, %v474
    %v476 = vshll.u32 2475754826, %v470
    %v477 = vshrl.u32 2131351028, %v471
    %v478 = vor.u32 %v476, %v477
    %v479 = vshll.u32 2131351028, %v470
    %v480 = vshrl.u32 2102212464, %v471
    %v481 = vor.u32 %v479, %v480
    %v482 = vshll.u32 2102212464, %v470
    %v483 = vshrl.u32 920167782, %v471
    %v484 = vor.u32 %v482, %v483
    %v485 = vshll.u32 920167782, %v470
    %v486 = vshrl.u32 1326507024, %v471
    %v487 = vor.u32 %v485, %v486
    %vm488 = vcmp.lt.s32.totalorder %v469, 1
    %vm489 = vcmp.lt.s32.totalorder %v469, 2
    %vm490 = vcmp.lt.s32.totalorder %v469, 3
    %vm491 = vcmp.lt.s32.totalorder %v469, 4
    %v492 = vsel %vm488, %v472, %v475
    %v493 = vsel %vm491, %v481, 2102212464
    %v494 = vsel %vm490, %v478, %v493
    %v495 = vsel %vm489, %v492, %v494
    %v496 = vsel %vm488, %v475, %v478
    %v497 = vsel %vm491, %v484, 920167782
    %v498 = vsel %vm490, %v481, %v497
    %v499 = vsel %vm489, %v496, %v498
    %v500 = vsel %vm488, %v478, %v481
    %v501 = vsel %vm491, %v487, 1326507024
    %v502 = vsel %vm490, %v484, %v501
    %v503 = vsel %vm489, %v500, %v502
    %v504 = vshll.u32 %v464, 8
    %v505 = vand.u32 %v504, 65535
    %v506 = vshrl.u32 %v504, 16
    %v507 = vand.u32 %v503, 65535
    %v508 = vshrl.u32 %v503, 16
    %v509 = vmul.u32 %v505, %v507
    %v510 = vmul.u32 %v505, %v508
    %v511 = vmul.u32 %v506, %v507
    %v512 = vmul.u32 %v506, %v508
    %v513 = vshll.u32 %v510, 16
    %v514 = vshrl.u32 %v510, 16
    %v515 = vshll.u32 %v511, 16
    %v516 = vshrl.u32 %v511, 16
    %vm517 = vc.u32 %v509, %v513
    %v518 = vsel %vm517, 1, 0
    %v519 = vadd.s32 %v509, %v513
    %v520 = vadd.s32 %v512, %v518
    %vm521 = vc.u32 %v519, %v515
    %v522 = vsel %vm521, 1, 0
    %v523 = vadd.s32 %v519, %v515
    %v524 = vadd.s32 %v520, %v522
    %v525 = vadd.s32 %v524, %v514
    %v526 = vadd.s32 %v525, %v516
    %v527 = vand.u32 %v504, 65535
    %v528 = vshrl.u32 %v504, 16
    %v529 = vand.u32 %v499, 65535
    %v530 = vshrl.u32 %v499, 16
    %v531 = vmul.u32 %v527, %v529
    %v532 = vmul.u32 %v527, %v530
    %v533 = vmul.u32 %v528, %v529
    %v534 = vmul.u32 %v528, %v530
    %v535 = vshll.u32 %v532, 16
    %v536 = vshrl.u32 %v532, 16
    %v537 = vshll.u32 %v533, 16
    %v538 = vshrl.u32 %v533, 16
    %vm539 = vc.u32 %v531, %v535
    %v540 = vsel %vm539, 1, 0
    %v541 = vadd.s32 %v531, %v535
    %v542 = vadd.s32 %v534, %v540
    %vm543 = vc.u32 %v541, %v537
    %v544 = vsel %vm543, 1, 0
    %v545 = vadd.s32 %v541, %v537
    %v546 = vadd.s32 %v542, %v544
    %v547 = vadd.s32 %v546, %v536
    %v548 = vadd.s32 %v547, %v538
    %v549 = vmul.u32 %v504, %v495
    %v550 = vadd.s32 %v526, %v545
    %vm551 = vc.u32 %v526, %v545
    %v552 = vadd.s32 %v548, 1
    %v553 = vsel %vm551, %v552, %v548
    %v554 = vadd.s32 %v549, %v553
    %v555 = vadd.s32 %v554, 536870912
    %v556 = vshrl.u32 %v555, 30
    %v557 = vshll.u32 %v556, 30
    %v558 = vsub.s32 %v554, %v557
    %vm559 = vcmp.lt.s32.totalorder %v558, 0
    %v560 = vsub.s32 0, %v558
    %v561 = vsel %vm559, %v560, %v558
    %v562 = vclz %v561
    %v563 = vsub.s32 %v562, 2
    %vm564 = vcmp.gt.s32.totalorder 0, %v563
    %v565 = vsel %vm564, 0, %v563
    %v566 = vsub.s32 32, %v565
    %v567 = vshll.u32 %v558, %v565
    %v568 = vshrl.u32 %v550, %v566
    %v569 = vor.u32 %v567, %v568
    %v570 = vsub.s32 4294967266, %v565
    %v571 = vadd.s32 %v570, 127
    %v572 = vshll.u32 %v571, 23
    %v573 = vor.u32 4788187, %v572
    %v574 = vand.u32 2147483647, %v573
    %v576 = vcvt.s32.f32 %v569
    %v577 = vmul.f32 %v576, %v574
    %v578 = vxor.u32 %v577, 2147483648
    %v579 = vsel %vm458, %v578, %v577
    %v580 = vsub.s32 4, %v556
    %v581 = vsel %vm458, %v580, %v556
    %v582 = vsel %vm457, %v434, %v579
    %v583 = vsel %vm457, 0, %v581
    %v584 = vmul.f32 %v582, %v582
    %v585 = vmul.f32 %v584, -0.001358992
    %v586 = vadd.f32 %v585, 0.041655596
    %v587 = vmul.f32 %v584, %v586
    %v588 = vadd.f32 %v587, -0.4999988
    %v589 = vmul.f32 %v584, %v588
    %v590 = vadd.f32 1.0, %v589
    %v591 = vmul.f32 %v582, %v582
    %v592 = vmul.f32 %v591, -0.00019511016
    %v593 = vadd.f32 %v592, 0.008332121
    %v594 = vmul.f32 %v591, %v593
    %v595 = vadd.f32 %v594, -0.16666654
    %v596 = vmul.f32 %v591, %v595
    %v597 = vadd.f32 %v596, 1.0
    %v598 = vmul.f32 %v597, %v582
    %vm599 = vweird.f32 %v434
    %v600 = vand.u32 %v583, 3
    %vm601 = vcmp.lt.s32.totalorder %v600, 2
    %vm602 = vcmp.eq.s32.totalorder %v600, 0
    %v603 = vxor.u32 %v598, 2147483648
    %v604 = vsel %vm602, %v590, %v603
    %vm605 = vcmp.eq.s32.totalorder %v600, 2
    %v606 = vxor.u32 %v590, 2147483648
    %v607 = vsel %vm605, %v606, %v598
    %v608 = vsel %vm601, %v604, %v607
    %v609 = vsel %vm599, nan, %v608
    %v610 = vand.u32 2147483647, %v454
    %vm611 = vcmp.le.f32.partialorder %v610, 0.7853982
    %vm612 = vcmp.lt.s32.totalorder %v454, 0
    %v613 = vand.u32 %v454, 2139095040
    %v614 = vshrl.u32 %v613, 23
    %v615 = vsub.s32 %v614, 127
    %v616 = vand.u32 2147483647, %v454
    %v617 = vand.u32 %v616, 8388607
    %v618 = vor.u32 %v617, 8388608
    %v619 = vsub.s32 0, %v618
    %v620 = vadd.s32 %v615, 1
    %vm621 = vcmp.gt.s32.totalorder %v620, 0
    %v622 = vsel %vm621, %v620, 0
    %v623 = vshrl.u32 %v622, 5
    %v624 = vand.u32 %v622, 31
    %v625 = vsub.s32 32, %v624
    %v626 = vshrl.u32 683565275, %v625
    %v627 = vshll.u32 683565275, %v624
    %v628 = vshrl.u32 2475754826, %v625
    %v629 = vor.u32 %v627, %v628
    %v630 = vshll.u32 2475754826, %v624
    %v631 = vshrl.u32 2131351028, %v625
    %v632 = vor.u32 %v630, %v631
    %v633 = vshll.u32 2131351028, %v624
    %v634 = vshrl.u32 2102212464, %v625
    %v635 = vor.u32 %v633, %v634
    %v636 = vshll.u32 2102212464, %v624
    %v637 = vshrl.u32 920167782, %v625
    %v638 = vor.u32 %v636, %v637
    %v639 = vshll.u32 920167782, %v624
    %v640 = vshrl.u32 1326507024, %v625
    %v641 = vor.u32 %v639, %v640
    %vm642 = vcmp.lt.s32.totalorder %v623, 1
    %vm643 = vcmp.lt.s32.totalorder %v623, 2
    %vm644 = vcmp.lt.s32.totalorder %v623, 3
    %vm645 = vcmp.lt.s32.totalorder %v623, 4
    %v646 = vsel %vm642, %v626, %v629
    %v647 = vsel %vm645, %v635, 2102212464
    %v648 = vsel %vm644, %v632, %v647
    %v649 = vsel %vm643, %v646, %v648
    %v650 = vsel %vm642, %v629, %v632
    %v651 = vsel %vm645, %v638, 920167782
    %v652 = vsel %vm644, %v635, %v651
    %v653 = vsel %vm643, %v650, %v652
    %v654 = vsel %vm642, %v632, %v635
    %v655 = vsel %vm645, %v641, 1326507024
    %v656 = vsel %vm644, %v638, %v655
    %v657 = vsel %vm643, %v654, %v656
    %v658 = vshll.u32 %v618, 8
    %v659 = vand.u32 %v658, 65535
    %v660 = vshrl.u32 %v658, 16
    %v661 = vand.u32 %v657, 65535
    %v662 = vshrl.u32 %v657, 16
    %v663 = vmul.u32 %v659, %v661
    %v664 = vmul.u32 %v659, %v662
    %v665 = vmul.u32 %v660, %v661
    %v666 = vmul.u32 %v660, %v662
    %v667 = vshll.u32 %v664, 16
    %v668 = vshrl.u32 %v664, 16
    %v669 = vshll.u32 %v665, 16
    %v670 = vshrl.u32 %v665, 16
    %vm671 = vc.u32 %v663, %v667
    %v672 = vsel %vm671, 1, 0
    %v673 = vadd.s32 %v663, %v667
    %v674 = vadd.s32 %v666, %v672
    %vm675 = vc.u32 %v673, %v669
    %v676 = vsel %vm675, 1, 0
    %v677 = vadd.s32 %v673, %v669
    %v678 = vadd.s32 %v674, %v676
    %v679 = vadd.s32 %v678, %v668
    %v680 = vadd.s32 %v679, %v670
    %v681 = vand.u32 %v658, 65535
    %v682 = vshrl.u32 %v658, 16
    %v683 = vand.u32 %v653, 65535
    %v684 = vshrl.u32 %v653, 16
    %v685 = vmul.u32 %v681, %v683
    %v686 = vmul.u32 %v681, %v684
    %v687 = vmul.u32 %v682, %v683
    %v688 = vmul.u32 %v682, %v684
    %v689 = vshll.u32 %v686, 16
    %v690 = vshrl.u32 %v686, 16
    %v691 = vshll.u32 %v687, 16
    %v692 = vshrl.u32 %v687, 16
    %vm693 = vc.u32 %v685, %v689
    %v694 = vsel %vm693, 1, 0
    %v695 = vadd.s32 %v685, %v689
    %v696 = vadd.s32 %v688, %v694
    %vm697 = vc.u32 %v695, %v691
    %v698 = vsel %vm697, 1, 0
    %v699 = vadd.s32 %v695, %v691
    %v700 = vadd.s32 %v696, %v698
    %v701 = vadd.s32 %v700, %v690
    %v702 = vadd.s32 %v701, %v692
    %v703 = vmul.u32 %v658, %v649
    %v704 = vadd.s32 %v680, %v699
    %vm705 = vc.u32 %v680, %v699
    %v706 = vadd.s32 %v702, 1
    %v707 = vsel %vm705, %v706, %v702
    %v708 = vadd.s32 %v703, %v707
    %v709 = vadd.s32 %v708, 536870912
    %v710 = vshrl.u32 %v709, 30
    %v711 = vshll.u32 %v710, 30
    %v712 = vsub.s32 %v708, %v711
    %vm713 = vcmp.lt.s32.totalorder %v712, 0
    %v714 = vsub.s32 0, %v712
    %v715 = vsel %vm713, %v714, %v712
    %v716 = vclz %v715
    %v717 = vsub.s32 %v716, 2
    %vm718 = vcmp.gt.s32.totalorder 0, %v717
    %v719 = vsel %vm718, 0, %v717
    %v720 = vsub.s32 32, %v719
    %v721 = vshll.u32 %v712, %v719
    %v722 = vshrl.u32 %v704, %v720
    %v723 = vor.u32 %v721, %v722
    %v724 = vsub.s32 4294967266, %v719
    %v725 = vadd.s32 %v724, 127
    %v726 = vshll.u32 %v725, 23
    %v727 = vor.u32 4788187, %v726
    %v728 = vand.u32 2147483647, %v727
    %v730 = vcvt.s32.f32 %v723
    %v731 = vmul.f32 %v730, %v728
    %v732 = vxor.u32 %v731, 2147483648
    %v733 = vsel %vm612, %v732, %v731
    %v734 = vsub.s32 4, %v710
    %v735 = vsel %vm612, %v734, %v710
    %v736 = vsel %vm611, %v454, %v733
    %v737 = vsel %vm611, 0, %v735
    %v738 = vmul.f32 %v736, %v736
    %v739 = vmul.f32 %v738, -0.001358992
    %v740 = vadd.f32 %v739, 0.041655596
    %v741 = vmul.f32 %v738, %v740
    %v742 = vadd.f32 %v741, -0.4999988
    %v743 = vmul.f32 %v738, %v742
    %v744 = vadd.f32 1.0, %v743
    %v745 = vmul.f32 %v736, %v736
    %v746 = vmul.f32 %v745, -0.00019511016
    %v747 = vadd.f32 %v746, 0.008332121
    %v748 = vmul.f32 %v745, %v747
    %v749 = vadd.f32 %v748, -0.16666654
    %v750 = vmul.f32 %v745, %v749
    %v751 = vadd.f32 %v750, 1.0
    %v752 = vmul.f32 %v751, %v736
    %vm753 = vweird.f32 %v454
    %v754 = vand.u32 %v737, 3
    %vm755 = vcmp.lt.s32.totalorder %v754, 2
    %vm756 = vcmp.eq.s32.totalorder %v754, 0
    %v757 = vxor.u32 %v752, 2147483648
    %v758 = vsel %vm756, %v744, %v757
    %vm759 = vcmp.eq.s32.totalorder %v754, 2
    %v760 = vxor.u32 %v744, 2147483648
    %v761 = vsel %vm759, %v760, %v752
    %v762 = vsel %vm755, %v758, %v761
    %v763 = vsel %vm753, nan, %v762
    %v764 = vld [vmem:[#allocation8] sm:$0xff]
    %v765 = vld [vmem:[#allocation8 + $0x8] sm:$0xff]
    %v766 = vld [vmem:[#allocation8 + $0x10] sm:$0xff]
    %v767 = vld [vmem:[#allocation8 + $0x18] sm:$0xff]
    %v768 = vld [vmem:[#allocation8 + $0x20] sm:$0xff]
    %v769 = vld [vmem:[#allocation8 + $0x28] sm:$0xff]
    %v770 = vld [vmem:[#allocation8 + $0x30] sm:$0xff]
    %v771 = vld [vmem:[#allocation8 + $0x38] sm:$0xff]
    %v772 = vld [vmem:[#allocation8 + $0x40] sm:$0xff]
    %v773 = vld [vmem:[#allocation8 + $0x48] sm:$0xff]
    %v774 = vld [vmem:[#allocation8 + $0x50] sm:$0xff]
    %v775 = vld [vmem:[#allocation8 + $0x58] sm:$0xff]
    %v776 = vld [vmem:[#allocation8 + $0x60] sm:$0xff]
    %v777 = vld [vmem:[#allocation8 + $0x68] sm:$0xff]
    %v778 = vld [vmem:[#allocation8 + $0x70] sm:$0xff]
    %v779 = vld [vmem:[#allocation8 + $0x78] sm:$0xff]
    %v780 = vld [vmem:[#allocation8 + $0x80] sm:$0xff]
    %v781 = vld [vmem:[#allocation8 + $0x88] sm:$0xff]
    %v782 = vld [vmem:[#allocation8 + $0x90] sm:$0xff]
    %v783 = vld [vmem:[#allocation8 + $0x98] sm:$0xff]
    %v784 = vld [vmem:[#allocation8 + $0xa0] sm:$0xff]
    %v785 = vld [vmem:[#allocation8 + $0xa8] sm:$0xff]
    %v786 = vld [vmem:[#allocation8 + $0xb0] sm:$0xff]
    %v787 = vld [vmem:[#allocation8 + $0xb8] sm:$0xff]
    %v788 = vld [vmem:[#allocation8 + $0xc0] sm:$0xff]
    %v789 = vld [vmem:[#allocation8 + $0xc8] sm:$0xff]
    %v790 = vld [vmem:[#allocation8 + $0xd0] sm:$0xff]
    %v791 = vld [vmem:[#allocation8 + $0xd8] sm:$0xff]
    %v792 = vld [vmem:[#allocation8 + $0xe0] sm:$0xff]
    %v793 = vld [vmem:[#allocation8 + $0xe8] sm:$0xff]
    %v794 = vld [vmem:[#allocation8 + $0xf0] sm:$0xff]
    %v795 = vld [vmem:[#allocation8 + $0xf8] sm:$0xff]
    %796 = vmatpush.msra.mxu0 %v779
    %797 = vmatpush.msra.mxu0 %v778
    %798 = vmatpush.msra.mxu0 %v777
    %799 = vmatpush.msra.mxu0 %v776
    %800 = vmatpush.msra.mxu0 %v775
    %801 = vmatpush.msra.mxu0 %v774
    %802 = vmatpush.msra.mxu0 %v773
    %803 = vmatpush.msra.mxu0 %v772
    %804 = vmatpush.msra.mxu0 %v771
    %805 = vmatpush.msra.mxu0 %v770
    %806 = vmatpush.msra.mxu0 %v769
    %807 = vmatpush.msra.mxu0 %v768
    %808 = vmatpush.msra.mxu0 %v767
    %809 = vmatpush.msra.mxu0 %v766
    %810 = vmatpush.msra.mxu0 %v765
    %811 = vmatpush.msra.mxu0 %v764
    %812 = vmatmul.f32.gmra.mxu0 %v609
    %v813 = vpop.f32.mrf.mxu0
    %v814 = vadd.f32 0.0, %v813
    %815 = vdwg.mxu0
    %816 = vmatpush.msra.mxu0 %v795
    %817 = vmatpush.msra.mxu0 %v794
    %818 = vmatpush.msra.mxu0 %v793
    %819 = vmatpush.msra.mxu0 %v792
    %820 = vmatpush.msra.mxu0 %v791
    %821 = vmatpush.msra.mxu0 %v790
    %822 = vmatpush.msra.mxu0 %v789
    %823 = vmatpush.msra.mxu0 %v788
    %824 = vmatpush.msra.mxu0 %v787
    %825 = vmatpush.msra.mxu0 %v786
    %826 = vmatpush.msra.mxu0 %v785
    %827 = vmatpush.msra.mxu0 %v784
    %828 = vmatpush.msra.mxu0 %v783
    %829 = vmatpush.msra.mxu0 %v782
    %830 = vmatpush.msra.mxu0 %v781
    %831 = vmatpush.msra.mxu0 %v780
    %832 = vmatmul.f32.gmra.mxu0 %v763
    %v833 = vpop.f32.mrf.mxu0
    %v834 = vadd.f32 %v814, %v833
    %835 = vdwg.mxu0
    %836 = vst [vmem:[#allocation10] sm:$0xff] %v834
    // Predicated region
    $region38: #{tpu_custom_call.1} parent=1 // pred_check
      _
    $region39: #{tpu_custom_call.1} parent=1 // pred_check_branch
      %838 = sbr.rel (0) target = $region41
    $region40: #{tpu_custom_call.1} parent=1 // pred_region
      %840 = vsyncadd [#allocation4], 0
      %s842 = sshll.u32 [#allocation10], 4
      %s843 = int_to_ptr.vmem [resolvable:$true] %s842
      %s844 = sshll.u32 %s5, 4
      %s845 = int_to_ptr.hbm [resolvable:$true] %s844
      %847 = dma.vmem_to_hbm [thread:$0]  %s843, 128, %s845, [#allocation4]
    $region41: #{tpu_custom_call.1} parent=1 // pred_fallthru
      _
    // Predicated region
    $region42: #{tpu_custom_call.1} parent=1 // pred_check
      _
    $region43: #{tpu_custom_call.1} parent=1 // pred_check_branch
      %849 = sbr.rel (0) target = $region45
    $region44: #{tpu_custom_call.1} parent=1 // pred_region
      %851 = dma.done [#allocation4], 128
    $region45: #{tpu_custom_call.1} parent=1 // pred_fallthru
      _
    %852 = vsyncpa [#allocation3], 1
    %853 = vsyncpa [#allocation6], 1
    %854 = vsyncpa [#allocation9], 1
    %855 = vsyncpa [#allocation4], 1

</llo_original>
